<compile_context>
chip_gen: v5e
topology: v5e:2x2
jax: 0.10.0
libtpu: 0.0.40
codegen_flags: <defaults>
</compile_context>

<pallas_src>
import functools

import jax
import jax.numpy as jnp
from jax import lax
from jax.experimental import pallas as pl
from jax.experimental.pallas import tpu as pltpu


def _selfsup_kernel(predict_ref, up_ref, low_ref, target_ref,
                    sim_ref, dice_ref, ce_ref, total_ref,
                    inter_acc, upsq_acc, lowsq_acc,
                    interd_acc, psum_acc, tsum_acc, ce_acc,
                    *, sw, dw, cw, n_pix, compute_ce):
    smooth = 1e-5
    step = pl.program_id(0)
    nsteps = pl.num_programs(0)

    @pl.when(step == 0)
    def _init():
        for ref in (inter_acc, upsq_acc, lowsq_acc,
                    interd_acc, psum_acc, tsum_acc, ce_acc):
            ref[...] = jnp.zeros_like(ref)

    predict = predict_ref[...].astype(jnp.float32)       # (B, C, T)
    up = up_ref[...].astype(jnp.float32)                  # (B, C, T)
    low = low_ref[...].astype(jnp.float32)                # (B, C, T)
    tgt = target_ref[...]                                  # (B, T) int32
    B, C, T = predict.shape

    # ---- similarity partial sums (reduced over the lane/spatial axis) ----
    inter_acc[...] += jnp.sum(up * low, axis=-1)           # (B, C)
    upsq_acc[...] += jnp.sum(up * up, axis=-1)
    lowsq_acc[...] += jnp.sum(low * low, axis=-1)

    # ---- channel softmax (reductions over the small sublane axis C) ----
    m = jnp.max(predict, axis=1, keepdims=True)            # (B, 1, T)
    e = jnp.exp(predict - m)                                # (B, C, T)
    denom = jnp.sum(e, axis=1, keepdims=True)               # (B, 1, T)
    inv_denom = pl.reciprocal(denom, approx=True)           # EUP, VALU relief
    probs = e * inv_denom                                    # (B, C, T)

    # one-hot mask via iota compare (tile-local only; no full-size temporaries)
    onehot = lax.broadcasted_iota(jnp.int32, (B, C, T), 1) == tgt[:, None, :]

    # ---- dice partial sums ----
    interd_acc[...] += jnp.sum(jnp.where(onehot, probs, 0.0), axis=-1)
    psum_acc[...] += jnp.sum(probs, axis=-1)
    tsum_acc[...] += jnp.sum(jnp.where(onehot, 1.0, 0.0), axis=-1)

    # ---- cross-entropy partial sums (statically skipped when unused) ----
    if compute_ce:
        neglogp = (m + jnp.log(denom)) - predict            # -log softmax, (B, C, T)
        ce_acc[...] += jnp.sum(jnp.where(onehot, neglogp, 0.0), axis=-1)

    @pl.when(step == nsteps - 1)
    def _finalize():
        inter = jnp.sum(inter_acc[...])
        upsq = jnp.sum(upsq_acc[...])
        lowsq = jnp.sum(lowsq_acc[...])
        sim = 1.0 - (inter + smooth) / (jnp.sqrt(upsq * lowsq) + smooth)

        i_d = interd_acc[...]
        ps = psum_acc[...]
        ts = tsum_acc[...]
        dice = 1.0 - (2.0 * i_d + smooth) / (ps + ts + smooth)
        dice_loss = jnp.sum(dice) / float(i_d.size)

        if compute_ce:
            ce_loss = jnp.sum(ce_acc[...]) / float(n_pix)
        else:
            ce_loss = jnp.float32(0.0)

        total = sw * sim + dw * dice_loss + cw * ce_loss

        sim_ref[0, 0] = sim
        dice_ref[0, 0] = dice_loss
        ce_ref[0, 0] = ce_loss
        total_ref[0, 0] = total


def _pick_block_lanes(hw, b, c, max_block_bytes=2 * 1024 * 1024):
    """Largest multiple of 128 dividing hw with B*C*T*4 <= max_block_bytes."""
    if hw % 128 != 0:
        return hw                                   # full-extent block (allowed)
    cap = max(128, (max_block_bytes // (b * c * 4)) // 128 * 128)
    t = min(hw, cap)
    t = (t // 128) * 128
    while t > 128 and hw % t != 0:
        t -= 128
    return t if hw % t == 0 else hw


def self_sup_loss(predict, up_output, low_output, target,
                  similarity_weight=1.0, dice_weight=1.0, ce_weight=0.0,
                  show_all=False, block_lanes=None):
    """Pallas implementation of SelfSupLoss.forward((predict, up, low), target)."""
    B, C, H, W = predict.shape
    HW = H * W

    # Lane-dense layout: NCHW -> (B, C, H*W); target -> (B, H*W) int32.
    p3 = predict.reshape(B, C, HW)
    u3 = up_output.reshape(B, C, HW)
    l3 = low_output.reshape(B, C, HW)
    tgt = target.reshape(-1, HW).astype(jnp.int32)

    T = block_lanes if block_lanes is not None else _pick_block_lanes(HW, B, C)
    assert HW % T == 0, (HW, T)
    grid = (HW // T,)

    compute_ce = (float(ce_weight) != 0.0) or bool(show_all)

    kernel = functools.partial(
        _selfsup_kernel,
        sw=float(similarity_weight), dw=float(dice_weight), cw=float(ce_weight),
        n_pix=B * HW, compute_ce=compute_ce)

    scalar_out = jax.ShapeDtypeStruct((1, 1), jnp.float32)
    out_specs = tuple(
        pl.BlockSpec((1, 1), lambda i: (0, 0), memory_space=pltpu.SMEM)
        for _ in range(4))
    scratch = [pltpu.VMEM((B, C), jnp.float32) for _ in range(7)]

    sim, dice, ce, total = pl.pallas_call(
        kernel,
        out_shape=(scalar_out, scalar_out, scalar_out, scalar_out),
        grid_spec=pltpu.PrefetchScalarGridSpec(
            num_scalar_prefetch=0,
            grid=grid,
            in_specs=[
                pl.BlockSpec((B, C, T), lambda i: (0, 0, i)),
                pl.BlockSpec((B, C, T), lambda i: (0, 0, i)),
                pl.BlockSpec((B, C, T), lambda i: (0, 0, i)),
                pl.BlockSpec((B, T), lambda i: (0, i)),
            ],
            out_specs=out_specs,
            scratch_shapes=scratch,
        ),
        compiler_params=pltpu.CompilerParams(
            dimension_semantics=("arbitrary",)),
    )(p3, u3, l3, tgt)

    sim = sim[0, 0]
    dice = dice[0, 0]
    ce = ce[0, 0]
    total = total[0, 0]
    if show_all:
        return sim, dice, ce, total
    return total


# ---------------- pure-JAX reference (validation only) ----------------
def _reference(predict, up, low, target, sw=1.0, dw=1.0, cw=0.0):
    smooth = 1e-5
    B, C, H, W = predict.shape
    tgt = target.reshape(-1, H, W).astype(jnp.int32)

    inter = jnp.sum(up * low)
    sim = 1.0 - (inter + smooth) / (
        jnp.sqrt(jnp.sum(up ** 2) * jnp.sum(low ** 2)) + smooth)

    onehot = jax.nn.one_hot(tgt, C, axis=1)                 # (B, C, H, W)
    probs = jax.nn.softmax(predict, axis=1)
    inter_d = jnp.sum(probs * onehot, axis=(-2, -1))
    dice = jnp.mean(1.0 - (2.0 * inter_d + smooth) /
                    (jnp.sum(probs, axis=(-2, -1)) +
                     jnp.sum(onehot, axis=(-2, -1)) + smooth))

    logp = jax.nn.log_softmax(predict, axis=1)
    ce = jnp.mean(-jnp.sum(onehot * logp, axis=1))
    total = sw * sim + dw * dice + cw * ce
    return sim, dice, ce, total


if __name__ == "__main__":
    key = jax.random.PRNGKey(0)
    k1, k2, k3, k4 = jax.random.split(key, 4)

    B, C, H, W = 2, 4, 16, 16
    predict = jax.random.normal(k1, (B, C, H, W), dtype=jnp.float32)
    up_output = jax.random.normal(k2, (B, C, H, W), dtype=jnp.float32)
    low_output = jax.random.normal(k3, (B, C, H, W), dtype=jnp.float32)
    target = jax.random.randint(k4, (B, 1, H, W), 0, C, dtype=jnp.int32)

    rsim, rdice, rce, rtotal = _reference(predict, up_output, low_output, target)

    # 1) default config (ce_weight=0 -> CE branch statically skipped)
    total = jax.block_until_ready(
        self_sup_loss(predict, up_output, low_output, target))
    assert jnp.allclose(total, rtotal, rtol=5e-3, atol=5e-3), (total, rtotal)

    # 2) multi-tile grid (exercises accumulator init/finalize + pipelining)
    total2 = jax.block_until_ready(
        self_sup_loss(predict, up_output, low_output, target, block_lanes=128))
    assert jnp.allclose(total2, rtotal, rtol=5e-3, atol=5e-3), (total2, rtotal)

    # 3) show_all with nonzero CE weight
    rsim2, rdice2, rce2, rtotal2 = _reference(
        predict, up_output, low_output, target, cw=0.5)
    sim, dice, ce, tot = jax.block_until_ready(
        self_sup_loss(predict, up_output, low_output, target,
                      ce_weight=0.5, show_all=True))
    assert jnp.allclose(sim, rsim2, rtol=5e-3, atol=5e-3), (sim, rsim2)
    assert jnp.allclose(dice, rdice2, rtol=5e-3, atol=5e-3), (dice, rdice2)
    assert jnp.allclose(ce, rce2, rtol=5e-3, atol=5e-3), (ce, rce2)
    assert jnp.allclose(tot, rtotal2, rtol=5e-3, atol=5e-3), (tot, rtotal2)

    print("KERNEL_OK")
</pallas_src>

<mosaic_0001>
module attributes {stable_mosaic.version = 11 : i64} {
  func.func @_selfsup_kernel(%arg0: i32, %arg1: memref<2x4x256xf32, #tpu.memory_space<vmem>>, %arg2: memref<2x4x256xf32, #tpu.memory_space<vmem>>, %arg3: memref<2x4x256xf32, #tpu.memory_space<vmem>>, %arg4: memref<2x256xi32, #tpu.memory_space<vmem>>, %arg5: memref<1x1xf32, #tpu.memory_space<smem>>, %arg6: memref<1x1xf32, #tpu.memory_space<smem>>, %arg7: memref<1x1xf32, #tpu.memory_space<smem>>, %arg8: memref<1x1xf32, #tpu.memory_space<smem>>, %arg9: memref<2x4xf32, #tpu.memory_space<vmem>>, %arg10: memref<2x4xf32, #tpu.memory_space<vmem>>, %arg11: memref<2x4xf32, #tpu.memory_space<vmem>>, %arg12: memref<2x4xf32, #tpu.memory_space<vmem>>, %arg13: memref<2x4xf32, #tpu.memory_space<vmem>>, %arg14: memref<2x4xf32, #tpu.memory_space<vmem>>, %arg15: memref<2x4xf32, #tpu.memory_space<vmem>>) attributes {dimension_semantics = [#tpu.dimension_semantics<arbitrary>], iteration_bounds = array<i64: 1>, scalar_prefetch = 0 : i64, scratch_operands = 7 : i64, tpu.core_type = #tpu.core_type<tc>, window_params = [{transform_indices = @transform_0, window_bounds = array<i64: 2, 4, 256>}, {transform_indices = @transform_1, window_bounds = array<i64: 2, 4, 256>}, {transform_indices = @transform_2, window_bounds = array<i64: 2, 4, 256>}, {transform_indices = @transform_3, window_bounds = array<i64: 2, 256>}, {transform_indices = @transform_4, window_bounds = array<i64: 1, 1>}, {transform_indices = @transform_5, window_bounds = array<i64: 1, 1>}, {transform_indices = @transform_6, window_bounds = array<i64: 1, 1>}, {transform_indices = @transform_7, window_bounds = array<i64: 1, 1>}]} {
    %c0_i32 = arith.constant 0 : i32
    %0 = arith.cmpi eq, %arg0, %c0_i32 : i32
    %1 = arith.extui %0 : i1 to i32
    %c0_i32_0 = arith.constant 0 : i32
    %2 = arith.cmpi ne, %1, %c0_i32_0 : i32
    scf.if %2 {
      %cst_47 = arith.constant 0.000000e+00 : f32
      %56 = vector.broadcast %cst_47 : f32 to vector<2x4xf32>
      %c0_48 = arith.constant 0 : index
      %c0_49 = arith.constant 0 : index
      %57 = vector.load %arg9[%c0_48, %c0_49] : memref<2x4xf32, #tpu.memory_space<vmem>>, vector<2x4xf32>
      tpu.vector_store %arg9[%c0_48, %c0_49], %56 {strides = array<i32>} : memref<2x4xf32, #tpu.memory_space<vmem>>, vector<2x4xf32>,
      %cst_50 = arith.constant 0.000000e+00 : f32
      %58 = vector.broadcast %cst_50 : f32 to vector<2x4xf32>
      %c0_51 = arith.constant 0 : index
      %c0_52 = arith.constant 0 : index
      %59 = vector.load %arg10[%c0_51, %c0_52] : memref<2x4xf32, #tpu.memory_space<vmem>>, vector<2x4xf32>
      tpu.vector_store %arg10[%c0_51, %c0_52], %58 {strides = array<i32>} : memref<2x4xf32, #tpu.memory_space<vmem>>, vector<2x4xf32>,
      %cst_53 = arith.constant 0.000000e+00 : f32
      %60 = vector.broadcast %cst_53 : f32 to vector<2x4xf32>
      %c0_54 = arith.constant 0 : index
      %c0_55 = arith.constant 0 : index
      %61 = vector.load %arg11[%c0_54, %c0_55] : memref<2x4xf32, #tpu.memory_space<vmem>>, vector<2x4xf32>
      tpu.vector_store %arg11[%c0_54, %c0_55], %60 {strides = array<i32>} : memref<2x4xf32, #tpu.memory_space<vmem>>, vector<2x4xf32>,
      %cst_56 = arith.constant 0.000000e+00 : f32
      %62 = vector.broadcast %cst_56 : f32 to vector<2x4xf32>
      %c0_57 = arith.constant 0 : index
      %c0_58 = arith.constant 0 : index
      %63 = vector.load %arg12[%c0_57, %c0_58] : memref<2x4xf32, #tpu.memory_space<vmem>>, vector<2x4xf32>
      tpu.vector_store %arg12[%c0_57, %c0_58], %62 {strides = array<i32>} : memref<2x4xf32, #tpu.memory_space<vmem>>, vector<2x4xf32>,
      %cst_59 = arith.constant 0.000000e+00 : f32
      %64 = vector.broadcast %cst_59 : f32 to vector<2x4xf32>
      %c0_60 = arith.constant 0 : index
      %c0_61 = arith.constant 0 : index
      %65 = vector.load %arg13[%c0_60, %c0_61] : memref<2x4xf32, #tpu.memory_space<vmem>>, vector<2x4xf32>
      tpu.vector_store %arg13[%c0_60, %c0_61], %64 {strides = array<i32>} : memref<2x4xf32, #tpu.memory_space<vmem>>, vector<2x4xf32>,
      %cst_62 = arith.constant 0.000000e+00 : f32
      %66 = vector.broadcast %cst_62 : f32 to vector<2x4xf32>
      %c0_63 = arith.constant 0 : index
      %c0_64 = arith.constant 0 : index
      %67 = vector.load %arg14[%c0_63, %c0_64] : memref<2x4xf32, #tpu.memory_space<vmem>>, vector<2x4xf32>
      tpu.vector_store %arg14[%c0_63, %c0_64], %66 {strides = array<i32>} : memref<2x4xf32, #tpu.memory_space<vmem>>, vector<2x4xf32>,
      %cst_65 = arith.constant 0.000000e+00 : f32
      %68 = vector.broadcast %cst_65 : f32 to vector<2x4xf32>
      %c0_66 = arith.constant 0 : index
      %c0_67 = arith.constant 0 : index
      %69 = vector.load %arg15[%c0_66, %c0_67] : memref<2x4xf32, #tpu.memory_space<vmem>>, vector<2x4xf32>
      tpu.vector_store %arg15[%c0_66, %c0_67], %68 {strides = array<i32>} : memref<2x4xf32, #tpu.memory_space<vmem>>, vector<2x4xf32>,
    } else {
    }
    %c0 = arith.constant 0 : index
    %c0_1 = arith.constant 0 : index
    %c0_2 = arith.constant 0 : index
    %3 = vector.load %arg1[%c0, %c0_1, %c0_2] : memref<2x4x256xf32, #tpu.memory_space<vmem>>, vector<2x4x256xf32>
    %c0_3 = arith.constant 0 : index
    %c0_4 = arith.constant 0 : index
    %c0_5 = arith.constant 0 : index
    %4 = vector.load %arg2[%c0_3, %c0_4, %c0_5] : memref<2x4x256xf32, #tpu.memory_space<vmem>>, vector<2x4x256xf32>
    %c0_6 = arith.constant 0 : index
    %c0_7 = arith.constant 0 : index
    %c0_8 = arith.constant 0 : index
    %5 = vector.load %arg3[%c0_6, %c0_7, %c0_8] : memref<2x4x256xf32, #tpu.memory_space<vmem>>, vector<2x4x256xf32>
    %c0_9 = arith.constant 0 : index
    %c0_10 = arith.constant 0 : index
    %6 = vector.load %arg4[%c0_9, %c0_10] : memref<2x256xi32, #tpu.memory_space<vmem>>, vector<2x256xi32>
    %c0_11 = arith.constant 0 : index
    %c0_12 = arith.constant 0 : index
    %7 = vector.load %arg9[%c0_11, %c0_12] : memref<2x4xf32, #tpu.memory_space<vmem>>, vector<2x4xf32>
    %8 = arith.mulf %4, %5 : vector<2x4x256xf32>
    %cst = arith.constant dense<0.000000e+00> : vector<2x4xf32>
    %9 = vector.multi_reduction <add>, %8, %cst [2] : vector<2x4x256xf32> to vector<2x4xf32>
    %10 = arith.addf %7, %9 : vector<2x4xf32>
    %c0_13 = arith.constant 0 : index
    %c0_14 = arith.constant 0 : index
    %11 = vector.load %arg9[%c0_13, %c0_14] : memref<2x4xf32, #tpu.memory_space<vmem>>, vector<2x4xf32>
    tpu.vector_store %arg9[%c0_13, %c0_14], %10 {strides = array<i32>} : memref<2x4xf32, #tpu.memory_space<vmem>>, vector<2x4xf32>,
    %c0_15 = arith.constant 0 : index
    %c0_16 = arith.constant 0 : index
    %12 = vector.load %arg10[%c0_15, %c0_16] : memref<2x4xf32, #tpu.memory_space<vmem>>, vector<2x4xf32>
    %13 = arith.mulf %4, %4 : vector<2x4x256xf32>
    %cst_17 = arith.constant dense<0.000000e+00> : vector<2x4xf32>
    %14 = vector.multi_reduction <add>, %13, %cst_17 [2] : vector<2x4x256xf32> to vector<2x4xf32>
    %15 = arith.addf %12, %14 : vector<2x4xf32>
    %c0_18 = arith.constant 0 : index
    %c0_19 = arith.constant 0 : index
    %16 = vector.load %arg10[%c0_18, %c0_19] : memref<2x4xf32, #tpu.memory_space<vmem>>, vector<2x4xf32>
    tpu.vector_store %arg10[%c0_18, %c0_19], %15 {strides = array<i32>} : memref<2x4xf32, #tpu.memory_space<vmem>>, vector<2x4xf32>,
    %c0_20 = arith.constant 0 : index
    %c0_21 = arith.constant 0 : index
    %17 = vector.load %arg11[%c0_20, %c0_21] : memref<2x4xf32, #tpu.memory_space<vmem>>, vector<2x4xf32>
    %18 = arith.mulf %5, %5 : vector<2x4x256xf32>
    %cst_22 = arith.constant dense<0.000000e+00> : vector<2x4xf32>
    %19 = vector.multi_reduction <add>, %18, %cst_22 [2] : vector<2x4x256xf32> to vector<2x4xf32>
    %20 = arith.addf %17, %19 : vector<2x4xf32>
    %c0_23 = arith.constant 0 : index
    %c0_24 = arith.constant 0 : index
    %21 = vector.load %arg11[%c0_23, %c0_24] : memref<2x4xf32, #tpu.memory_space<vmem>>, vector<2x4xf32>
    tpu.vector_store %arg11[%c0_23, %c0_24], %20 {strides = array<i32>} : memref<2x4xf32, #tpu.memory_space<vmem>>, vector<2x4xf32>,
    %cst_25 = arith.constant dense<0xFF800000> : vector<2x256xf32>
    %22 = vector.multi_reduction <maximumf>, %3, %cst_25 [1] : vector<2x4x256xf32> to vector<2x256xf32>
    %23 = vector.shape_cast %22 : vector<2x256xf32> to vector<2x1x256xf32>
    %24 = vector.broadcast %23 : vector<2x1x256xf32> to vector<2x4x256xf32>
    %25 = arith.subf %3, %24 : vector<2x4x256xf32>
    %26 = math.exp %25 : vector<2x4x256xf32>
    %cst_26 = arith.constant dense<0.000000e+00> : vector<2x256xf32>
    %27 = vector.multi_reduction <add>, %26, %cst_26 [1] : vector<2x4x256xf32> to vector<2x256xf32>
    %28 = vector.shape_cast %27 : vector<2x256xf32> to vector<2x1x256xf32>
    %29 = tpu.reciprocal %28 {approx = true} : vector<2x1x256xf32> -> vector<2x1x256xf32>
    %30 = vector.broadcast %29 : vector<2x1x256xf32> to vector<2x4x256xf32>
    %31 = arith.mulf %26, %30 : vector<2x4x256xf32>
    %32 = tpu.iota {dimensions = array<i32: 1>} : vector<2x4x256xi32>
    %33 = vector.shape_cast %6 : vector<2x256xi32> to vector<2x1x256xi32>
    %34 = vector.broadcast %33 : vector<2x1x256xi32> to vector<2x4x256xi32>
    %35 = arith.cmpi eq, %32, %34 : vector<2x4x256xi32>
    %c0_27 = arith.constant 0 : index
    %c0_28 = arith.constant 0 : index
    %36 = vector.load %arg12[%c0_27, %c0_28] : memref<2x4xf32, #tpu.memory_space<vmem>>, vector<2x4xf32>
    %cst_29 = arith.constant 0.000000e+00 : f32
    %37 = vector.broadcast %cst_29 : f32 to vector<2x4x256xf32>
    %38 = arith.select %35, %31, %37 : vector<2x4x256xi1>, vector<2x4x256xf32>
    %cst_30 = arith.constant dense<0.000000e+00> : vector<2x4xf32>
    %39 = vector.multi_reduction <add>, %38, %cst_30 [2] : vector<2x4x256xf32> to vector<2x4xf32>
    %40 = arith.addf %36, %39 : vector<2x4xf32>
    %c0_31 = arith.constant 0 : index
    %c0_32 = arith.constant 0 : index
    %41 = vector.load %arg12[%c0_31, %c0_32] : memref<2x4xf32, #tpu.memory_space<vmem>>, vector<2x4xf32>
    tpu.vector_store %arg12[%c0_31, %c0_32], %40 {strides = array<i32>} : memref<2x4xf32, #tpu.memory_space<vmem>>, vector<2x4xf32>,
    %c0_33 = arith.constant 0 : index
    %c0_34 = arith.constant 0 : index
    %42 = vector.load %arg13[%c0_33, %c0_34] : memref<2x4xf32, #tpu.memory_space<vmem>>, vector<2x4xf32>
    %cst_35 = arith.constant dense<0.000000e+00> : vector<2x4xf32>
    %43 = vector.multi_reduction <add>, %31, %cst_35 [2] : vector<2x4x256xf32> to vector<2x4xf32>
    %44 = arith.addf %42, %43 : vector<2x4xf32>
    %c0_36 = arith.constant 0 : index
    %c0_37 = arith.constant 0 : index
    %45 = vector.load %arg13[%c0_36, %c0_37] : memref<2x4xf32, #tpu.memory_space<vmem>>, vector<2x4xf32>
    tpu.vector_store %arg13[%c0_36, %c0_37], %44 {strides = array<i32>} : memref<2x4xf32, #tpu.memory_space<vmem>>, vector<2x4xf32>,
    %c0_38 = arith.constant 0 : index
    %c0_39 = arith.constant 0 : index
    %46 = vector.load %arg14[%c0_38, %c0_39] : memref<2x4xf32, #tpu.memory_space<vmem>>, vector<2x4xf32>
    %cst_40 = arith.constant 1.000000e+00 : f32
    %cst_41 = arith.constant 0.000000e+00 : f32
    %47 = vector.broadcast %cst_40 : f32 to vector<2x4x256xf32>
    %48 = vector.broadcast %cst_41 : f32 to vector<2x4x256xf32>
    %49 = arith.select %35, %47, %48 : vector<2x4x256xi1>, vector<2x4x256xf32>
    %cst_42 = arith.constant dense<0.000000e+00> : vector<2x4xf32>
    %50 = vector.multi_reduction <add>, %49, %cst_42 [2] : vector<2x4x256xf32> to vector<2x4xf32>
    %51 = arith.addf %46, %50 : vector<2x4xf32>
    %c0_43 = arith.constant 0 : index
    %c0_44 = arith.constant 0 : index
    %52 = vector.load %arg14[%c0_43, %c0_44] : memref<2x4xf32, #tpu.memory_space<vmem>>, vector<2x4xf32>
    tpu.vector_store %arg14[%c0_43, %c0_44], %51 {strides = array<i32>} : memref<2x4xf32, #tpu.memory_space<vmem>>, vector<2x4xf32>,
    %c0_i32_45 = arith.constant 0 : i32
    %53 = arith.cmpi eq, %arg0, %c0_i32_45 : i32
    %54 = arith.extui %53 : i1 to i32
    %c0_i32_46 = arith.constant 0 : i32
    %55 = arith.cmpi ne, %54, %c0_i32_46 : i32
    scf.if %55 {
      %c0_47 = arith.constant 0 : index
      %c0_48 = arith.constant 0 : index
      %56 = vector.load %arg9[%c0_47, %c0_48] : memref<2x4xf32, #tpu.memory_space<vmem>>, vector<2x4xf32>
      %57 = vector.shape_cast %56 : vector<2x4xf32> to vector<1x2x4xf32>
      %cst_49 = arith.constant dense<0.000000e+00> : vector<1xf32>
      %58 = vector.multi_reduction <add>, %57, %cst_49 [1, 2] : vector<1x2x4xf32> to vector<1xf32>
      %59 = vector.shape_cast %58 : vector<1xf32> to vector<1x1x1xf32>
      %60 = vector.extract %59[0, 0, 0] : f32 from vector<1x1x1xf32>
      %c0_50 = arith.constant 0 : index
      %c0_51 = arith.constant 0 : index
      %61 = vector.load %arg10[%c0_50, %c0_51] : memref<2x4xf32, #tpu.memory_space<vmem>>, vector<2x4xf32>
      %62 = vector.shape_cast %61 : vector<2x4xf32> to vector<1x2x4xf32>
      %cst_52 = arith.constant dense<0.000000e+00> : vector<1xf32>
      %63 = vector.multi_reduction <add>, %62, %cst_52 [1, 2] : vector<1x2x4xf32> to vector<1xf32>
      %64 = vector.shape_cast %63 : vector<1xf32> to vector<1x1x1xf32>
      %65 = vector.extract %64[0, 0, 0] : f32 from vector<1x1x1xf32>
      %c0_53 = arith.constant 0 : index
      %c0_54 = arith.constant 0 : index
      %66 = vector.load %arg11[%c0_53, %c0_54] : memref<2x4xf32, #tpu.memory_space<vmem>>, vector<2x4xf32>
      %67 = vector.shape_cast %66 : vector<2x4xf32> to vector<1x2x4xf32>
      %cst_55 = arith.constant dense<0.000000e+00> : vector<1xf32>
      %68 = vector.multi_reduction <add>, %67, %cst_55 [1, 2] : vector<1x2x4xf32> to vector<1xf32>
      %69 = vector.shape_cast %68 : vector<1xf32> to vector<1x1x1xf32>
      %70 = vector.extract %69[0, 0, 0] : f32 from vector<1x1x1xf32>
      %cst_56 = arith.constant 9.99999974E-6 : f32
      %71 = arith.addf %60, %cst_56 : f32
      %72 = arith.mulf %65, %70 : f32
      %73 = math.sqrt %72 : f32
      %cst_57 = arith.constant 9.99999974E-6 : f32
      %74 = arith.addf %73, %cst_57 : f32
      %75 = arith.divf %71, %74 : f32
      %cst_58 = arith.constant 1.000000e+00 : f32
      %76 = arith.subf %cst_58, %75 : f32
      %c0_59 = arith.constant 0 : index
      %c0_60 = arith.constant 0 : index
      %77 = vector.load %arg12[%c0_59, %c0_60] : memref<2x4xf32, #tpu.memory_space<vmem>>, vector<2x4xf32>
      %c0_61 = arith.constant 0 : index
      %c0_62 = arith.constant 0 : index
      %78 = vector.load %arg13[%c0_61, %c0_62] : memref<2x4xf32, #tpu.memory_space<vmem>>, vector<2x4xf32>
      %c0_63 = arith.constant 0 : index
      %c0_64 = arith.constant 0 : index
      %79 = vector.load %arg14[%c0_63, %c0_64] : memref<2x4xf32, #tpu.memory_space<vmem>>, vector<2x4xf32>
      %cst_65 = arith.constant 2.000000e+00 : f32
      %80 = vector.broadcast %cst_65 : f32 to vector<2x4xf32>
      %81 = arith.mulf %80, %77 : vector<2x4xf32>
      %cst_66 = arith.constant 9.99999974E-6 : f32
      %82 = vector.broadcast %cst_66 : f32 to vector<2x4xf32>
      %83 = arith.addf %81, %82 : vector<2x4xf32>
      %84 = arith.addf %78, %79 : vector<2x4xf32>
      %cst_67 = arith.constant 9.99999974E-6 : f32
      %85 = vector.broadcast %cst_67 : f32 to vector<2x4xf32>
      %86 = arith.addf %84, %85 : vector<2x4xf32>
      %87 = arith.divf %83, %86 : vector<2x4xf32>
      %cst_68 = arith.constant 1.000000e+00 : f32
      %88 = vector.broadcast %cst_68 : f32 to vector<2x4xf32>
      %89 = arith.subf %88, %87 : vector<2x4xf32>
      %90 = vector.shape_cast %89 : vector<2x4xf32> to vector<1x2x4xf32>
      %cst_69 = arith.constant dense<0.000000e+00> : vector<1xf32>
      %91 = vector.multi_reduction <add>, %90, %cst_69 [1, 2] : vector<1x2x4xf32> to vector<1xf32>
      %92 = vector.shape_cast %91 : vector<1xf32> to vector<1x1x1xf32>
      %93 = vector.extract %92[0, 0, 0] : f32 from vector<1x1x1xf32>
      %cst_70 = arith.constant 8.000000e+00 : f32
      %94 = arith.divf %93, %cst_70 : f32
      %cst_71 = arith.constant 1.000000e+00 : f32
      %95 = arith.mulf %cst_71, %76 : f32
      %cst_72 = arith.constant 1.000000e+00 : f32
      %96 = arith.mulf %cst_72, %94 : f32
      %97 = arith.addf %95, %96 : f32
      %cst_73 = arith.constant 0.000000e+00 : f32
      %cst_74 = arith.constant 0.000000e+00 : f32
      %98 = arith.mulf %cst_73, %cst_74 : f32
      %99 = arith.addf %97, %98 : f32
      %c0_75 = arith.constant 0 : index
      %c0_76 = arith.constant 0 : index
      %100 = memref.load %arg5[%c0_75, %c0_76] : memref<1x1xf32, #tpu.memory_space<smem>>
      memref.store %76, %arg5[%c0_75, %c0_76] : memref<1x1xf32, #tpu.memory_space<smem>>
      %c0_77 = arith.constant 0 : index
      %c0_78 = arith.constant 0 : index
      %101 = memref.load %arg6[%c0_77, %c0_78] : memref<1x1xf32, #tpu.memory_space<smem>>
      memref.store %94, %arg6[%c0_77, %c0_78] : memref<1x1xf32, #tpu.memory_space<smem>>
      %cst_79 = arith.constant 0.000000e+00 : f32
      %c0_80 = arith.constant 0 : index
      %c0_81 = arith.constant 0 : index
      %102 = memref.load %arg7[%c0_80, %c0_81] : memref<1x1xf32, #tpu.memory_space<smem>>
      memref.store %cst_79, %arg7[%c0_80, %c0_81] : memref<1x1xf32, #tpu.memory_space<smem>>
      %c0_82 = arith.constant 0 : index
      %c0_83 = arith.constant 0 : index
      %103 = memref.load %arg8[%c0_82, %c0_83] : memref<1x1xf32, #tpu.memory_space<smem>>
      memref.store %99, %arg8[%c0_82, %c0_83] : memref<1x1xf32, #tpu.memory_space<smem>>
    } else {
    }
    return
  }
  func.func @transform_0(%arg0: i32) -> (i32, i32, i32) {
    %c0_i32 = arith.constant 0 : i32
    %c0_i32_0 = arith.constant 0 : i32
    %c0_i32_1 = arith.constant 0 : i32
    return %c0_i32, %c0_i32_0, %arg0 : i32, i32, i32
  }
  func.func @transform_1(%arg0: i32) -> (i32, i32, i32) {
    %c0_i32 = arith.constant 0 : i32
    %c0_i32_0 = arith.constant 0 : i32
    %c0_i32_1 = arith.constant 0 : i32
    return %c0_i32, %c0_i32_0, %arg0 : i32, i32, i32
  }
  func.func @transform_2(%arg0: i32) -> (i32, i32, i32) {
    %c0_i32 = arith.constant 0 : i32
    %c0_i32_0 = arith.constant 0 : i32
    %c0_i32_1 = arith.constant 0 : i32
    return %c0_i32, %c0_i32_0, %arg0 : i32, i32, i32
  }
  func.func @transform_3(%arg0: i32) -> (i32, i32) {
    %c0_i32 = arith.constant 0 : i32
    %c0_i32_0 = arith.constant 0 : i32
    return %c0_i32, %arg0 : i32, i32
  }
  func.func @transform_4(%arg0: i32) -> (i32, i32) {
    %c0_i32 = arith.constant 0 : i32
    %c0_i32_0 = arith.constant 0 : i32
    %c0_i32_1 = arith.constant 0 : i32
    return %c0_i32, %c0_i32_0 : i32, i32
  }
  func.func @transform_5(%arg0: i32) -> (i32, i32) {
    %c0_i32 = arith.constant 0 : i32
    %c0_i32_0 = arith.constant 0 : i32
    %c0_i32_1 = arith.constant 0 : i32
    return %c0_i32, %c0_i32_0 : i32, i32
  }
  func.func @transform_6(%arg0: i32) -> (i32, i32) {
    %c0_i32 = arith.constant 0 : i32
    %c0_i32_0 = arith.constant 0 : i32
    %c0_i32_1 = arith.constant 0 : i32
    return %c0_i32, %c0_i32_0 : i32, i32
  }
  func.func @transform_7(%arg0: i32) -> (i32, i32) {
    %c0_i32 = arith.constant 0 : i32
    %c0_i32_0 = arith.constant 0 : i32
    %c0_i32_1 = arith.constant 0 : i32
    return %c0_i32, %c0_i32_0 : i32, i32
  }
}

</mosaic_0001>

<llo_original>
// kernel: tpu_custom_call.1
$region0: #{tpu_custom_call.1}
  #allocation0 [shape = 'u32[]', space=smem, size = 0x4, offset = 0x4, fixed_abs, tag = 'smem constant byte address 0x4 - core index']
  #allocation1 [shape = 'u32[72,128]{1,0:T(1,128)}', space=vmem, size = 0x9000, scoped, tag = 'internal scratch']
  #allocation2 [shape = 'f32[2,4]{1,0:T(2,128)}', space=vmem, size = 0x400, scoped, tag = 'scratch operand']
  #allocation3 [shape = 'f32[2,4]{1,0:T(2,128)}', space=vmem, size = 0x400, scoped, tag = 'scratch operand']
  #allocation4 [shape = 'f32[2,4]{1,0:T(2,128)}', space=vmem, size = 0x400, scoped, tag = 'scratch operand']
  #allocation5 [shape = 'f32[2,4]{1,0:T(2,128)}', space=vmem, size = 0x400, scoped, tag = 'scratch operand']
  #allocation6 [shape = 'f32[2,4]{1,0:T(2,128)}', space=vmem, size = 0x400, scoped, tag = 'scratch operand']
  #allocation7 [shape = 'f32[2,4]{1,0:T(2,128)}', space=vmem, size = 0x400, scoped, tag = 'scratch operand']
  #allocation8 [shape = 'f32[2,4]{1,0:T(2,128)}', space=vmem, size = 0x400, scoped, tag = 'scratch operand']
  %s0 = inlined_call_operand.hbm [shape: f32[2,4,256], index: 0, kind: input, shape index: {}]
  %s1 = inlined_call_operand.hbm [shape: f32[2,4,256], index: 1, kind: input, shape index: {}]
  %s2 = inlined_call_operand.hbm [shape: f32[2,4,256], index: 2, kind: input, shape index: {}]
  %s3 = inlined_call_operand.hbm [shape: s32[2,256], index: 3, kind: input, shape index: {}]
  %s4 = inlined_call_operand.hbm [shape: f32[1,1], index: 4, kind: output, shape index: {0}]
  %s5 = inlined_call_operand.hbm [shape: f32[1,1], index: 5, kind: output, shape index: {1}]
  %s6 = inlined_call_operand.hbm [shape: f32[1,1], index: 6, kind: output, shape index: {2}]
  %s7 = inlined_call_operand.hbm [shape: f32[1,1], index: 7, kind: output, shape index: {3}]
  %8 = xla_tuple %s4, %s5, %s6, %s7
  %s9 = sld [smem:[#allocation0]]
  $region74: #{tpu_custom_call.1} parent=0
    _
  %s11 = ssub.s32 1, %s9
  %s12 = scalar_select 0, %s11, %s9
  $region1: #{tpu_custom_call.1} parent=0
    #allocation9 [shape = 'u8[8192]{0}', space=vmem, size = 0x2000, scoped, tag = 'input window, operand 0, single buffered']
    #allocation10 [shape = 's32[1]{0}', space=sflag, size = 0x4, scoped, tag = 'scoped memory for tpu_custom_call.1']
    #allocation11 [shape = 's32[1]{0}', space=sflag, size = 0x4, scoped, tag = 'scoped memory for tpu_custom_call.1']
    #allocation12 [shape = 'u8[8192]{0}', space=vmem, size = 0x2000, scoped, tag = 'input window, operand 1, single buffered']
    #allocation13 [shape = 's32[1]{0}', space=sflag, size = 0x4, scoped, tag = 'scoped memory for tpu_custom_call.1']
    #allocation14 [shape = 'u8[8192]{0}', space=vmem, size = 0x2000, scoped, tag = 'input window, operand 2, single buffered']
    #allocation15 [shape = 'u8[2048]{0}', space=vmem, size = 0x800, scoped, tag = 'input window, operand 3, single buffered']
    #allocation16 [shape = 's32[1]{0}', space=sflag, size = 0x4, scoped, tag = 'scoped memory for tpu_custom_call.1']
    #allocation17 [shape = 'u8[512]{0}', space=smem, size = 0x200, scoped, tag = 'output window, operand 0, single buffered']
    #allocation18 [shape = 'u8[512]{0}', space=smem, size = 0x200, scoped, tag = 'output window, operand 1, single buffered']
    #allocation19 [shape = 's32[1]{0}', space=sflag, size = 0x4, scoped, tag = 'scoped memory for tpu_custom_call.1']
    #allocation20 [shape = 'u8[512]{0}', space=smem, size = 0x200, scoped, tag = 'output window, operand 2, single buffered']
    #allocation21 [shape = 'u8[512]{0}', space=smem, size = 0x200, scoped, tag = 'output window, operand 3, single buffered']
    #allocation22 [shape = 's32[1]{0}', space=sflag, size = 0x4, scoped, tag = 'scoped memory for tpu_custom_call.1']
    %13 = vsyncpa [#allocation10], 0
    %14 = vsyncpa [#allocation13], 0
    %15 = vsyncpa [#allocation16], 0
    %16 = vsyncpa [#allocation11], 0
    %17 = vsyncpa [#allocation19], 0
    %18 = vsyncpa [#allocation22], 0
    // Predicated region
    $region2: #{tpu_custom_call.1} parent=1 // pred_check
      _
    $region3: #{tpu_custom_call.1} parent=1 // pred_check_branch
      %20 = sbr.rel (0) target = $region5
    $region4: #{tpu_custom_call.1} parent=1 // pred_region
      %22 = vsyncadd [#allocation10], 0
      %s23 = sshll.u32 %s0, 4
      %s24 = int_to_ptr.hbm [resolvable:$true] %s23
      %s25 = sshll.u32 [#allocation9], 4
      %s26 = int_to_ptr.vmem [resolvable:$true] %s25
      %31 = dma.hbm_to_vmem [thread:$0]  %s24, 256, %s26, [#allocation10], 128, 128, 8
    $region5: #{tpu_custom_call.1} parent=1 // pred_fallthru
      _
    // Predicated region
    $region6: #{tpu_custom_call.1} parent=1 // pred_check
      _
    $region7: #{tpu_custom_call.1} parent=1 // pred_check_branch
      %33 = sbr.rel (0) target = $region9
    $region8: #{tpu_custom_call.1} parent=1 // pred_region
      %35 = vsyncadd [#allocation13], 0
      %s36 = sshll.u32 %s1, 4
      %s37 = int_to_ptr.hbm [resolvable:$true] %s36
      %s38 = sshll.u32 [#allocation12], 4
      %s39 = int_to_ptr.vmem [resolvable:$true] %s38
      %44 = dma.hbm_to_vmem [thread:$0]  %s37, 256, %s39, [#allocation13], 128, 128, 8
    $region9: #{tpu_custom_call.1} parent=1 // pred_fallthru
      _
    // Predicated region
    $region10: #{tpu_custom_call.1} parent=1 // pred_check
      _
    $region11: #{tpu_custom_call.1} parent=1 // pred_check_branch
      %46 = sbr.rel (0) target = $region13
    $region12: #{tpu_custom_call.1} parent=1 // pred_region
      %48 = vsyncadd [#allocation13], 0
      %s49 = sshll.u32 %s2, 4
      %s50 = int_to_ptr.hbm [resolvable:$true] %s49
      %s51 = sshll.u32 [#allocation14], 4
      %s52 = int_to_ptr.vmem [resolvable:$true] %s51
      %57 = dma.hbm_to_vmem [thread:$0]  %s50, 256, %s52, [#allocation13], 128, 128, 8
    $region13: #{tpu_custom_call.1} parent=1 // pred_fallthru
      _
    // Predicated region
    $region14: #{tpu_custom_call.1} parent=1 // pred_check
      _
    $region15: #{tpu_custom_call.1} parent=1 // pred_check_branch
      %59 = sbr.rel (0) target = $region17
    $region16: #{tpu_custom_call.1} parent=1 // pred_region
      %61 = vsyncadd [#allocation16], 0
      %s63 = sshll.u32 %s3, 4
      %s64 = int_to_ptr.hbm [resolvable:$true] %s63
      %s65 = sshll.u32 [#allocation15], 4
      %s66 = int_to_ptr.vmem [resolvable:$true] %s65
      %68 = dma.hbm_to_vmem [thread:$0]  %s64, 64, %s66, [#allocation16]
    $region17: #{tpu_custom_call.1} parent=1 // pred_fallthru
      _
    // Predicated region
    $region18: #{tpu_custom_call.1} parent=1 // pred_check
      _
    $region19: #{tpu_custom_call.1} parent=1 // pred_check_branch
      %70 = sbr.rel (0) target = $region21
    $region20: #{tpu_custom_call.1} parent=1 // pred_region
      %72 = dma.done [#allocation10], 256
    $region21: #{tpu_custom_call.1} parent=1 // pred_fallthru
      _
    // Predicated region
    $region22: #{tpu_custom_call.1} parent=1 // pred_check
      _
    $region23: #{tpu_custom_call.1} parent=1 // pred_check_branch
      %74 = sbr.rel (0) target = $region25
    $region24: #{tpu_custom_call.1} parent=1 // pred_region
      %76 = dma.done [#allocation13], 256
    $region25: #{tpu_custom_call.1} parent=1 // pred_fallthru
      _
    // Predicated region
    $region26: #{tpu_custom_call.1} parent=1 // pred_check
      _
    $region27: #{tpu_custom_call.1} parent=1 // pred_check_branch
      %78 = sbr.rel (0) target = $region29
    $region28: #{tpu_custom_call.1} parent=1 // pred_region
      %80 = dma.done [#allocation13], 256
    $region29: #{tpu_custom_call.1} parent=1 // pred_fallthru
      _
    // Predicated region
    $region30: #{tpu_custom_call.1} parent=1 // pred_check
      _
    $region31: #{tpu_custom_call.1} parent=1 // pred_check_branch
      %82 = sbr.rel (0) target = $region33
    $region32: #{tpu_custom_call.1} parent=1 // pred_region
      %84 = dma.done [#allocation16], 64
    $region33: #{tpu_custom_call.1} parent=1 // pred_fallthru
      _
    %p85 = scmp.eq.s32.totalorder 0, 0
    // Predicated region
    $region34: #{tpu_custom_call.1} parent=1 // pred_check
      %p86 = pneg %p85
    $region35: #{tpu_custom_call.1} parent=1 // pred_check_branch
      %88 = sbr.rel (%p86) target = $region37
    $region36: #{tpu_custom_call.1} parent=1 // pred_region
      %vm89 = vcmask 25600
      %90 = vst.msk [vmem:[#allocation2] sm:$0x3] %vm89, 0.0
      %91 = vst.msk [vmem:[#allocation3] sm:$0x3] %vm89, 0.0
      %92 = vst.msk [vmem:[#allocation4] sm:$0x3] %vm89, 0.0
      %93 = vst.msk [vmem:[#allocation5] sm:$0x3] %vm89, 0.0
      %94 = vst.msk [vmem:[#allocation6] sm:$0x3] %vm89, 0.0
      %95 = vst.msk [vmem:[#allocation7] sm:$0x3] %vm89, 0.0
      %96 = vst.msk [vmem:[#allocation8] sm:$0x3] %vm89, 0.0
    $region37: #{tpu_custom_call.1} parent=1 // pred_fallthru
      _
    %v97 = vld [vmem:[#allocation9] sm:$0xff]
    %v98 = vld [vmem:[#allocation9 + $0x8] sm:$0xff]
    %v99 = vld [vmem:[#allocation12] sm:$0xff]
    %v100 = vld [vmem:[#allocation12 + $0x8] sm:$0xff]
    %v101 = vld [vmem:[#allocation14] sm:$0xff]
    %v102 = vld [vmem:[#allocation14 + $0x8] sm:$0xff]
    %v103 = vld [vmem:[#allocation15] sm:$0xf]
    %v104 = vld [vmem:[#allocation2] sm:$0x3]
    %v105 = vmul.f32 %v99, %v101
    %v106 = vmul.f32 %v100, %v102
    %109 = vst [vmem:[#allocation1] ss:$2 sm:$0xff] %v105
    %v110 = vld.sshfl [vmem:[#allocation1] sm:$0xff pattern:$0x75316420]
    %v111 = vld.sshfl [vmem:[#allocation1 + $0x8] sm:$0xff pattern:$0x75316420]
    %s112 = scalar_lea.vmem [#allocation1], 16
    %113 = vst [vmem:[%s112] ss:$2 sm:$0xff] %v106
    %v114 = vld.sshfl [vmem:[#allocation1 + $0x10] sm:$0xff pattern:$0x75316420]
    %v115 = vld.sshfl [vmem:[#allocation1 + $0x18] sm:$0xff pattern:$0x75316420]
    %vm120 = vcmask 1043456
    %v121 = vsel %vm120, %v110, 0.0
    %v122 = vsel %vm120, %v111, 0.0
    %v123 = vadd.f32 %v121, %v122
    %124 = vadd.xlane.f32.xlu0 %v123
    %v125 = vpop.xlane.xlu0 %124
    %v126 = vsel %vm120, %v114, 0.0
    %v127 = vsel %vm120, %v115, 0.0
    %v128 = vadd.f32 %v126, %v127
    %129 = vadd.xlane.f32.xlu0 %v128
    %v130 = vpop.xlane.xlu0 %129
    %v133 = vlaneseq
    %v134 = vand.u32 %v133, 127
    %v135 = vperm.slane %v125, %v134
    %v136 = vperm.slane %v130, %v134
    %vm137 = vcmask 1041409
    %v138 = vsel %vm137, %v136, %v135
    %v140 = vadd.f32 %v104, %v138
    %vm141 = vcmask 25600
    %142 = vst.msk [vmem:[#allocation2] sm:$0x3] %vm141, %v140
    %v143 = vld [vmem:[#allocation3] sm:$0x3]
    %v144 = vmul.f32 %v99, %v99
    %v145 = vmul.f32 %v100, %v100
    %148 = vst [vmem:[#allocation1] ss:$2 sm:$0xff] %v144
    %v149 = vld.sshfl [vmem:[#allocation1] sm:$0xff pattern:$0x75316420]
    %v150 = vld.sshfl [vmem:[#allocation1 + $0x8] sm:$0xff pattern:$0x75316420]
    %s151 = scalar_lea.vmem [#allocation1], 16
    %152 = vst [vmem:[%s151] ss:$2 sm:$0xff] %v145
    %v153 = vld.sshfl [vmem:[#allocation1 + $0x10] sm:$0xff pattern:$0x75316420]
    %v154 = vld.sshfl [vmem:[#allocation1 + $0x18] sm:$0xff pattern:$0x75316420]
    %v159 = vsel %vm120, %v149, 0.0
    %v160 = vsel %vm120, %v150, 0.0
    %v161 = vadd.f32 %v159, %v160
    %162 = vadd.xlane.f32.xlu0 %v161
    %v163 = vpop.xlane.xlu0 %162
    %v164 = vsel %vm120, %v153, 0.0
    %v165 = vsel %vm120, %v154, 0.0
    %v166 = vadd.f32 %v164, %v165
    %167 = vadd.xlane.f32.xlu0 %v166
    %v168 = vpop.xlane.xlu0 %167
    %v171 = vperm.slane %v163, %v134
    %v172 = vperm.slane %v168, %v134
    %v173 = vsel %vm137, %v172, %v171
    %v175 = vadd.f32 %v143, %v173
    %176 = vst.msk [vmem:[#allocation3] sm:$0x3] %vm141, %v175
    %v177 = vld [vmem:[#allocation4] sm:$0x3]
    %v178 = vmul.f32 %v101, %v101
    %v179 = vmul.f32 %v102, %v102
    %182 = vst [vmem:[#allocation1] ss:$2 sm:$0xff] %v178
    %v183 = vld.sshfl [vmem:[#allocation1] sm:$0xff pattern:$0x75316420]
    %v184 = vld.sshfl [vmem:[#allocation1 + $0x8] sm:$0xff pattern:$0x75316420]
    %s185 = scalar_lea.vmem [#allocation1], 16
    %186 = vst [vmem:[%s185] ss:$2 sm:$0xff] %v179
    %v187 = vld.sshfl [vmem:[#allocation1 + $0x10] sm:$0xff pattern:$0x75316420]
    %v188 = vld.sshfl [vmem:[#allocation1 + $0x18] sm:$0xff pattern:$0x75316420]
    %v193 = vsel %vm120, %v183, 0.0
    %v194 = vsel %vm120, %v184, 0.0
    %v195 = vadd.f32 %v193, %v194
    %196 = vadd.xlane.f32.xlu0 %v195
    %v197 = vpop.xlane.xlu0 %196
    %v198 = vsel %vm120, %v187, 0.0
    %v199 = vsel %vm120, %v188, 0.0
    %v200 = vadd.f32 %v198, %v199
    %201 = vadd.xlane.f32.xlu0 %v200
    %v202 = vpop.xlane.xlu0 %201
    %v205 = vperm.slane %v197, %v134
    %v206 = vperm.slane %v202, %v134
    %v207 = vsel %vm137, %v206, %v205
    %v209 = vadd.f32 %v177, %v207
    %210 = vst.msk [vmem:[#allocation4] sm:$0x3] %vm141, %v209
    %213 = vst [vmem:[#allocation1] ss:$2 sm:$0xff] %v97
    %v214 = vld.sshfl [vmem:[#allocation1] sm:$0xff pattern:$0x75316420]
    %v215 = vld.sshfl [vmem:[#allocation1 + $0x8] sm:$0xff pattern:$0x75316420]
    %s216 = scalar_lea.vmem [#allocation1], 16
    %217 = vst [vmem:[%s216] ss:$2 sm:$0xff] %v98
    %v218 = vld.sshfl [vmem:[#allocation1 + $0x10] sm:$0xff pattern:$0x75316420]
    %v219 = vld.sshfl [vmem:[#allocation1 + $0x18] sm:$0xff pattern:$0x75316420]
    %v224 = vsel %vm120, %v214, -inf
    %v225 = vrot.slane %v224, 4
    %v226 = vmax.f32 %v224, %v225
    %v227 = vrot.slane %v226, 2
    %v228 = vmax.f32 %v226, %v227
    %v229 = vrot.slane %v228, 1
    %v230 = vmax.f32 %v228, %v229
    %v231 = vsel %vm120, %v215, -inf
    %v232 = vrot.slane %v231, 4
    %v233 = vmax.f32 %v231, %v232
    %v234 = vrot.slane %v233, 2
    %v235 = vmax.f32 %v233, %v234
    %v236 = vrot.slane %v235, 1
    %v237 = vmax.f32 %v235, %v236
    %v238 = vsel %vm120, %v218, -inf
    %v239 = vrot.slane %v238, 4
    %v240 = vmax.f32 %v238, %v239
    %v241 = vrot.slane %v240, 2
    %v242 = vmax.f32 %v240, %v241
    %v243 = vrot.slane %v242, 1
    %v244 = vmax.f32 %v242, %v243
    %v245 = vsel %vm120, %v219, -inf
    %v246 = vrot.slane %v245, 4
    %v247 = vmax.f32 %v245, %v246
    %v248 = vrot.slane %v247, 2
    %v249 = vmax.f32 %v247, %v248
    %v250 = vrot.slane %v249, 1
    %v251 = vmax.f32 %v249, %v250
    %v256 = vrot.slane %v237, 4
    %v257 = vrot.slane %v251, 4
    %v258 = vsel %vm120, %v230, %v256
    %v259 = vsel %vm120, %v244, %v257
    %v262 = vsub.f32 %v97, %v258
    %v263 = vsub.f32 %v98, %v259
    %v264 = vmul.f32 %v262, 1.442695
    %v265 = vpow.pop %v264
    %v266 = vmul.f32 %v263, 1.442695
    %v267 = vpow.pop %v266
    %270 = vst [vmem:[#allocation1] ss:$2 sm:$0xff] %v265
    %v271 = vld.sshfl [vmem:[#allocation1] sm:$0xff pattern:$0x75316420]
    %v272 = vld.sshfl [vmem:[#allocation1 + $0x8] sm:$0xff pattern:$0x75316420]
    %s273 = scalar_lea.vmem [#allocation1], 16
    %274 = vst [vmem:[%s273] ss:$2 sm:$0xff] %v267
    %v275 = vld.sshfl [vmem:[#allocation1 + $0x10] sm:$0xff pattern:$0x75316420]
    %v276 = vld.sshfl [vmem:[#allocation1 + $0x18] sm:$0xff pattern:$0x75316420]
    %v281 = vsel %vm120, %v271, 0.0
    %v282 = vrot.slane %v281, 4
    %v283 = vadd.f32 %v281, %v282
    %v284 = vrot.slane %v283, 2
    %v285 = vadd.f32 %v283, %v284
    %v286 = vrot.slane %v285, 1
    %v287 = vadd.f32 %v285, %v286
    %v288 = vsel %vm120, %v272, 0.0
    %v289 = vrot.slane %v288, 4
    %v290 = vadd.f32 %v288, %v289
    %v291 = vrot.slane %v290, 2
    %v292 = vadd.f32 %v290, %v291
    %v293 = vrot.slane %v292, 1
    %v294 = vadd.f32 %v292, %v293
    %v295 = vsel %vm120, %v275, 0.0
    %v296 = vrot.slane %v295, 4
    %v297 = vadd.f32 %v295, %v296
    %v298 = vrot.slane %v297, 2
    %v299 = vadd.f32 %v297, %v298
    %v300 = vrot.slane %v299, 1
    %v301 = vadd.f32 %v299, %v300
    %v302 = vsel %vm120, %v276, 0.0
    %v303 = vrot.slane %v302, 4
    %v304 = vadd.f32 %v302, %v303
    %v305 = vrot.slane %v304, 2
    %v306 = vadd.f32 %v304, %v305
    %v307 = vrot.slane %v306, 1
    %v308 = vadd.f32 %v306, %v307
    %v309 = vrcp.pop %v287
    %v310 = vrcp.pop %v294
    %v311 = vrcp.pop %v301
    %v312 = vrcp.pop %v308
    %v317 = vrot.slane %v310, 4
    %v318 = vrot.slane %v312, 4
    %v319 = vsel %vm120, %v309, %v317
    %v320 = vsel %vm120, %v311, %v318
    %v323 = vmul.f32 %v265, %v319
    %v324 = vmul.f32 %v267, %v320
    %v325 = vlaneseq
    %v326 = vshrl.u32 %v325, 7
    %v327 = vrot.slane %v103, 1
    %v328 = vrot.slane %v103, 2
    %v329 = vrot.slane %v103, 3
    %vm330 = vcmask 1040384
    %v331 = vsel %vm330, %v103, %v327
    %vm332 = vcmask 1042434
    %v333 = vsel %vm332, %v328, %v329
    %vm334 = vcmask 1041408
    %v335 = vsel %vm334, %v331, %v333
    %v336 = vsel %vm137, %v103, %v327
    %vm337 = vcmask 1043459
    %v338 = vsel %vm337, %v328, %v329
    %vm339 = vcmask 1042433
    %v340 = vsel %vm339, %v336, %v338
    %v341 = vrot.slane %v340, 1
    %v342 = vperm.slane %v335, 0
    %v343 = vperm.slane %v335, 1
    %v344 = vperm.slane %v341, 0
    %v345 = vperm.slane %v341, 1
    %vm346 = vcmp.eq.s32.totalorder %v326, %v342
    %vm347 = vcmp.eq.s32.totalorder %v326, %v343
    %vm348 = vcmp.eq.s32.totalorder %v326, %v344
    %vm349 = vcmp.eq.s32.totalorder %v326, %v345
    %v350 = vld [vmem:[#allocation5] sm:$0x3]
    %353 = vst [vmem:[#allocation1] ss:$2 sm:$0xff] %v323
    %v354 = vld.sshfl [vmem:[#allocation1] sm:$0xff pattern:$0x75316420]
    %v355 = vld.sshfl [vmem:[#allocation1 + $0x8] sm:$0xff pattern:$0x75316420]
    %s356 = scalar_lea.vmem [#allocation1], 16
    %357 = vst [vmem:[%s356] ss:$2 sm:$0xff] %v324
    %v358 = vld.sshfl [vmem:[#allocation1 + $0x10] sm:$0xff pattern:$0x75316420]
    %v359 = vld.sshfl [vmem:[#allocation1 + $0x18] sm:$0xff pattern:$0x75316420]
    %v364 = vsel %vm346, %v354, 0.0
    %v365 = vsel %vm347, %v355, 0.0
    %v366 = vsel %vm348, %v358, 0.0
    %v367 = vsel %vm349, %v359, 0.0
    %v368 = vsel %vm120, %v364, 0.0
    %v369 = vsel %vm120, %v365, 0.0
    %v370 = vadd.f32 %v368, %v369
    %371 = vadd.xlane.f32.xlu0 %v370
    %v372 = vpop.xlane.xlu0 %371
    %v373 = vsel %vm120, %v366, 0.0
    %v374 = vsel %vm120, %v367, 0.0
    %v375 = vadd.f32 %v373, %v374
    %376 = vadd.xlane.f32.xlu0 %v375
    %v377 = vpop.xlane.xlu0 %376
    %v380 = vperm.slane %v372, %v134
    %v381 = vperm.slane %v377, %v134
    %v382 = vsel %vm137, %v381, %v380
    %v384 = vadd.f32 %v350, %v382
    %385 = vst.msk [vmem:[#allocation5] sm:$0x3] %vm141, %v384
    %v386 = vld [vmem:[#allocation6] sm:$0x3]
    %387 = vst [vmem:[#allocation1] ss:$2 sm:$0xff] %v323
    %v388 = vld.sshfl [vmem:[#allocation1] sm:$0xff pattern:$0x75316420]
    %v389 = vld.sshfl [vmem:[#allocation1 + $0x8] sm:$0xff pattern:$0x75316420]
    %s390 = scalar_lea.vmem [#allocation1], 16
    %391 = vst [vmem:[%s390] ss:$2 sm:$0xff] %v324
    %v392 = vld.sshfl [vmem:[#allocation1 + $0x10] sm:$0xff pattern:$0x75316420]
    %v393 = vld.sshfl [vmem:[#allocation1 + $0x18] sm:$0xff pattern:$0x75316420]
    %v398 = vsel %vm120, %v388, 0.0
    %v399 = vsel %vm120, %v389, 0.0
    %v400 = vadd.f32 %v398, %v399
    %401 = vadd.xlane.f32.xlu0 %v400
    %v402 = vpop.xlane.xlu0 %401
    %v403 = vsel %vm120, %v392, 0.0
    %v404 = vsel %vm120, %v393, 0.0
    %v405 = vadd.f32 %v403, %v404
    %406 = vadd.xlane.f32.xlu0 %v405
    %v407 = vpop.xlane.xlu0 %406
    %v410 = vperm.slane %v402, %v134
    %v411 = vperm.slane %v407, %v134
    %v412 = vsel %vm137, %v411, %v410
    %v414 = vadd.f32 %v386, %v412
    %415 = vst.msk [vmem:[#allocation6] sm:$0x3] %vm141, %v414
    %v416 = vld [vmem:[#allocation7] sm:$0x3]
    %v417 = vsel %vm346, 1.0, 0.0
    %v418 = vsel %vm347, 1.0, 0.0
    %v419 = vsel %vm348, 1.0, 0.0
    %v420 = vsel %vm349, 1.0, 0.0
    %v421 = vsel %vm120, %v417, 0.0
    %v422 = vsel %vm120, %v418, 0.0
    %v423 = vadd.f32 %v421, %v422
    %424 = vadd.xlane.f32.xlu0 %v423
    %v425 = vpop.xlane.xlu0 %424
    %v426 = vsel %vm120, %v419, 0.0
    %v427 = vsel %vm120, %v420, 0.0
    %v428 = vadd.f32 %v426, %v427
    %429 = vadd.xlane.f32.xlu0 %v428
    %v430 = vpop.xlane.xlu0 %429
    %v433 = vperm.slane %v425, %v134
    %v434 = vperm.slane %v430, %v134
    %v435 = vsel %vm137, %v434, %v433
    %v437 = vadd.f32 %v416, %v435
    %438 = vst.msk [vmem:[#allocation7] sm:$0x3] %vm141, %v437
    // Predicated region
    $region38: #{tpu_custom_call.1} parent=1 // pred_check
      %p439 = pneg %p85
    $region39: #{tpu_custom_call.1} parent=1 // pred_check_branch
      %441 = sbr.rel (%p439) target = $region41
    $region40: #{tpu_custom_call.1} parent=1 // pred_region
      %v442 = vld [vmem:[#allocation2] sm:$0x3]
      %v443 = vsel %vm141, %v442, 0.0
      %444 = vadd.xlane.f32.xlu0 %v443
      %v445 = vpop.xlane.xlu0 %444
      %v446 = vrot.slane %v445, 4
      %v447 = vadd.f32 %v445, %v446
      %v448 = vrot.slane %v447, 2
      %v449 = vadd.f32 %v447, %v448
      %v450 = vrot.slane %v449, 1
      %v451 = vadd.f32 %v449, %v450
      %s452 = vtos %v451
      %v453 = vld [vmem:[#allocation3] sm:$0x3]
      %v454 = vsel %vm141, %v453, 0.0
      %455 = vadd.xlane.f32.xlu0 %v454
      %v456 = vpop.xlane.xlu0 %455
      %v457 = vrot.slane %v456, 4
      %v458 = vadd.f32 %v456, %v457
      %v459 = vrot.slane %v458, 2
      %v460 = vadd.f32 %v458, %v459
      %v461 = vrot.slane %v460, 1
      %v462 = vadd.f32 %v460, %v461
      %s463 = vtos %v462
      %v464 = vld [vmem:[#allocation4] sm:$0x3]
      %v465 = vsel %vm141, %v464, 0.0
      %466 = vadd.xlane.f32.xlu0 %v465
      %v467 = vpop.xlane.xlu0 %466
      %v468 = vrot.slane %v467, 4
      %v469 = vadd.f32 %v467, %v468
      %v470 = vrot.slane %v469, 2
      %v471 = vadd.f32 %v469, %v470
      %v472 = vrot.slane %v471, 1
      %v473 = vadd.f32 %v471, %v472
      %s474 = vtos %v473
      %s475 = sadd.f32 %s452, 1e-05
      %s476 = smul.f32 %s463, %s474
      %v477 = vstv %s476
      %v478 = vrsqrt.pop %v477
      %v479 = vmul.f32 %v478, %v477
      %v480 = vmul.f32 %v479, %v478
      %v481 = vmul.f32 0.5, %v480
      %v482 = vsub.f32 1.5, %v481
      %v483 = vmul.f32 %v478, %v482
      %v484 = vmul.f32 %v477, %v483
      %vm485 = vcmp.eq.f32.partialorder %v477, inf
      %v486 = vsel %vm485, %v477, %v484
      %vm487 = vcmp.eq.f32.partialorder %v477, 0.0
      %v488 = vand.u32 %v477, 2147483648
      %v489 = vsel %vm487, %v488, %v486
      %s490 = vtos %v489
      %s491 = sadd.f32 %s490, 1e-05
      %v492 = vstv %s491
      %v493 = vrcp.pop %v492
      %v494 = vmul.f32 %v492, %v493
      %v495 = vsub.f32 1.0, %v494
      %v496 = vmul.f32 %v493, %v495
      %v497 = vadd.f32 %v493, %v496
      %vm498 = vweird.f32 %v492
      %vm499 = vweird.f32 %v493
      %vm500 = vmor %vm498, %vm499
      %v501 = vsel %vm500, %v493, %v497
      %v502 = vand.u32 2147483647, %v492
      %vm503 = vcmp.eq.f32.partialorder %v502, 8.507059e+37
      %v504 = vand.u32 %v492, 2147483648
      %v505 = vor.u32 1.1754944e-38, %v504
      %v506 = vsel %vm503, %v505, %v501
      %s507 = vtos %v506
      %s508 = smul.f32 %s475, %s507
      %s509 = ssub.f32 1.0, %s508
      %v510 = vld [vmem:[#allocation5] sm:$0x3]
      %v511 = vld [vmem:[#allocation6] sm:$0x3]
      %v512 = vld [vmem:[#allocation7] sm:$0x3]
      %v513 = vmul.f32 %v510, 2.0
      %v514 = vadd.f32 %v513, 1e-05
      %v515 = vadd.f32 %v511, %v512
      %v516 = vadd.f32 %v515, 1e-05
      %v517 = vrcp.pop %v516
      %v518 = vmul.f32 %v516, %v517
      %v519 = vsub.f32 1.0, %v518
      %v520 = vmul.f32 %v517, %v519
      %v521 = vadd.f32 %v517, %v520
      %vm522 = vweird.f32 %v516
      %vm523 = vweird.f32 %v517
      %vm524 = vmor %vm522, %vm523
      %v525 = vsel %vm524, %v517, %v521
      %v526 = vand.u32 2147483647, %v516
      %vm527 = vcmp.eq.f32.partialorder %v526, 8.507059e+37
      %v528 = vand.u32 %v516, 2147483648
      %v529 = vor.u32 1.1754944e-38, %v528
      %v530 = vsel %vm527, %v529, %v525
      %v531 = vmul.f32 %v514, %v530
      %v532 = vsub.f32 1.0, %v531
      %v533 = vsel %vm141, %v532, 0.0
      %534 = vadd.xlane.f32.xlu0 %v533
      %v535 = vpop.xlane.xlu0 %534
      %v536 = vrot.slane %v535, 4
      %v537 = vadd.f32 %v535, %v536
      %v538 = vrot.slane %v537, 2
      %v539 = vadd.f32 %v537, %v538
      %v540 = vrot.slane %v539, 1
      %v541 = vadd.f32 %v539, %v540
      %s542 = vtos %v541
      %v543 = vrcp.pop 8.0
      %v544 = vmul.f32 8.0, %v543
      %v545 = vsub.f32 1.0, %v544
      %v546 = vmul.f32 %v543, %v545
      %v547 = vadd.f32 %v543, %v546
      %vm548 = vweird.f32 %v543
      %v549 = vsel %vm548, %v543, %v547
      %s550 = vtos %v549
      %s551 = smul.f32 %s542, %s550
      %s552 = sadd.f32 %s509, %s551
      %s553 = sadd.f32 %s552, 0.0
      %s554 = scalar_lea.smem [#allocation17], 0
      %555 = sst [smem:[%s554]] %s509
      %s556 = scalar_lea.smem [#allocation18], 0
      %557 = sst [smem:[%s556]] %s551
      %s558 = scalar_lea.smem [#allocation20], 0
      %559 = sst [smem:[%s558]] 0.0
      %s560 = scalar_lea.smem [#allocation21], 0
      %561 = sst [smem:[%s560]] %s553
    $region41: #{tpu_custom_call.1} parent=1 // pred_fallthru
      _
    // Predicated region
    $region42: #{tpu_custom_call.1} parent=1 // pred_check
      _
    $region43: #{tpu_custom_call.1} parent=1 // pred_check_branch
      %563 = sbr.rel (0) target = $region45
    $region44: #{tpu_custom_call.1} parent=1 // pred_region
      %565 = vsyncadd [#allocation11], 0
      %s567 = sshll.u32 %s4, 4
      %s568 = int_to_ptr.hbm [resolvable:$true] %s567
      %570 = dma.smem_to_hbm [#allocation17], 16, %s568, [#allocation11]
    $region45: #{tpu_custom_call.1} parent=1 // pred_fallthru
      _
    // Predicated region
    $region46: #{tpu_custom_call.1} parent=1 // pred_check
      _
    $region47: #{tpu_custom_call.1} parent=1 // pred_check_branch
      %572 = sbr.rel (0) target = $region49
    $region48: #{tpu_custom_call.1} parent=1 // pred_region
      %574 = vsyncadd [#allocation19], 0
      %s576 = sshll.u32 %s5, 4
      %s577 = int_to_ptr.hbm [resolvable:$true] %s576
      %579 = dma.smem_to_hbm [#allocation18], 16, %s577, [#allocation19]
    $region49: #{tpu_custom_call.1} parent=1 // pred_fallthru
      _
    // Predicated region
    $region50: #{tpu_custom_call.1} parent=1 // pred_check
      _
    $region51: #{tpu_custom_call.1} parent=1 // pred_check_branch
      %581 = sbr.rel (0) target = $region53
    $region52: #{tpu_custom_call.1} parent=1 // pred_region
      %583 = vsyncadd [#allocation19], 0
      %s585 = sshll.u32 %s6, 4
      %s586 = int_to_ptr.hbm [resolvable:$true] %s585
      %588 = dma.smem_to_hbm [#allocation20], 16, %s586, [#allocation19]
    $region53: #{tpu_custom_call.1} parent=1 // pred_fallthru
      _
    // Predicated region
    $region54: #{tpu_custom_call.1} parent=1 // pred_check
      _
    $region55: #{tpu_custom_call.1} parent=1 // pred_check_branch
      %590 = sbr.rel (0) target = $region57
    $region56: #{tpu_custom_call.1} parent=1 // pred_region
      %592 = vsyncadd [#allocation22], 0
      %s594 = sshll.u32 %s7, 4
      %s595 = int_to_ptr.hbm [resolvable:$true] %s594
      %597 = dma.smem_to_hbm [#allocation21], 16, %s595, [#allocation22]
    $region57: #{tpu_custom_call.1} parent=1 // pred_fallthru
      _
    // Predicated region
    $region58: #{tpu_custom_call.1} parent=1 // pred_check
      _
    $region59: #{tpu_custom_call.1} parent=1 // pred_check_branch
      %599 = sbr.rel (0) target = $region61
    $region60: #{tpu_custom_call.1} parent=1 // pred_region
      %601 = dma.done [#allocation11], 16
    $region61: #{tpu_custom_call.1} parent=1 // pred_fallthru
      _
    // Predicated region
    $region62: #{tpu_custom_call.1} parent=1 // pred_check
      _
    $region63: #{tpu_custom_call.1} parent=1 // pred_check_branch
      %603 = sbr.rel (0) target = $region65
    $region64: #{tpu_custom_call.1} parent=1 // pred_region
      %605 = dma.done [#allocation19], 16
    $region65: #{tpu_custom_call.1} parent=1 // pred_fallthru
      _
    // Predicated region
    $region66: #{tpu_custom_call.1} parent=1 // pred_check
      _
    $region67: #{tpu_custom_call.1} parent=1 // pred_check_branch
      %607 = sbr.rel (0) target = $region69
    $region68: #{tpu_custom_call.1} parent=1 // pred_region
      %609 = dma.done [#allocation19], 16
    $region69: #{tpu_custom_call.1} parent=1 // pred_fallthru
      _
    // Predicated region
    $region70: #{tpu_custom_call.1} parent=1 // pred_check
      _
    $region71: #{tpu_custom_call.1} parent=1 // pred_check_branch
      %611 = sbr.rel (0) target = $region73
    $region72: #{tpu_custom_call.1} parent=1 // pred_region
      %613 = dma.done [#allocation22], 16
    $region73: #{tpu_custom_call.1} parent=1 // pred_fallthru
      _
    %614 = sfence
    %615 = vsyncpa [#allocation10], 1
    %616 = vsyncpa [#allocation13], 1
    %617 = vsyncpa [#allocation16], 1
    %618 = vsyncpa [#allocation11], 1
    %619 = vsyncpa [#allocation19], 1
    %620 = vsyncpa [#allocation22], 1

</llo_original>
